<compile_context>
chip_gen: v5e
topology: v5e:2x2
jax: 0.10.0
libtpu: 0.0.40
codegen_flags: <defaults>
</compile_context>

<pallas_src>
import jax
import jax.numpy as jnp
from jax.experimental import pallas as pl
from jax.experimental.pallas import tpu as pltpu


def _round_up(x, m):
    return ((x + m - 1) // m) * m


def _vmem_capacity_bytes(default=64 * 1024 * 1024):
    """Physical VMEM of the current chip; conservative 64 MiB fallback."""
    try:
        return int(pltpu.get_tpu_info().vmem_capacity_bytes)
    except Exception:
        return default


def _pick_batch_tile(B, T, row_bytes, sublane, budget_bytes):
    """Largest sublane-multiple TB whose double-buffered footprint
    (2 pipeline buffers x both inputs x TB x lane-padded T) fits budget."""
    t_pad = _round_up(T, 128)                      # lane-padded VMEM width
    max_tb = budget_bytes // max(1, 2 * t_pad * row_bytes)
    max_tb = max(sublane, (max_tb // sublane) * sublane)
    b_pad = _round_up(B, sublane)
    return min(max_tb, b_pad)


def make_next_basket_loss(lagging: int, eps: float = 1e-7):
    def loss_fn(y_pred, y_true, lengths):
        B, T = y_pred.shape
        isz_p = y_pred.dtype.itemsize
        isz_t = y_true.dtype.itemsize
        # dtype-aware minimum sublane multiple: 8 (f32), 16 (bf16), 32 (int8/fp8)
        sublane = max(8, 32 // min(isz_p, isz_t))

        vmem_cap = _vmem_capacity_bytes()
        budget = (3 * vmem_cap) // 8               # ~48 MiB @128 MiB, ~24 MiB @64 MiB
        TB = _pick_batch_tile(B, T, isz_p + isz_t, sublane, budget)

        n_blocks = pl.cdiv(B, TB)                  # partial last block handled by mask
        NC = 2 if n_blocks >= 2 else 1             # shard batch across v7x's 2 TCs
        n_inner = pl.cdiv(n_blocks, NC)
        last_block = n_blocks - 1
        neg_inv_b = -1.0 / float(B)

        # Per-row gather index, clamped like jnp.take_along_axis would clamp.
        # (PyTorch gather assumes valid indices; clamping only changes OOB cases.)
        idx = jnp.clip(lengths.astype(jnp.int32) - lagging, 0, T - 1).reshape(B, 1)

        def block_map(c, i):
            # Flattened block id, clamped so extra megacore steps re-read the
            # last block (their rows are masked out in-kernel anyway).
            return (jnp.minimum(c * n_inner + i, last_block), 0)

        def kernel(idx_ref, yp_ref, yt_ref, out_ref, acc_ref):
            c = pl.program_id(0)
            i = pl.program_id(1)

            @pl.when(i == 0)
            def _init():
                acc_ref[...] = jnp.zeros_like(acc_ref)

            # --- gather the raw per-row element (VPU select + XLU lane reduce) ---
            # grid-invariant (1, T) iota; the compare broadcasts it against (TB, 1).
            col = jax.lax.broadcasted_iota(jnp.int32, (1, T), 1)
            sel = col == idx_ref[...]                           # (TB, T)

            yp = yp_ref[...]
            yt = yt_ref[...]
            # Select + row-sum in the *input* dtype (exact: one nonzero per row),
            # cast only the gathered (TB, 1) vectors to f32 for the loss math.
            yp_raw = jnp.sum(jnp.where(sel, yp, jnp.zeros_like(yp)),
                             axis=1, keepdims=True).astype(jnp.float32)
            yt_raw = jnp.sum(jnp.where(sel, yt, jnp.zeros_like(yt)),
                             axis=1, keepdims=True).astype(jnp.float32)

            # --- transcendentals only on the gathered (TB, 1) vectors ---
            p = jax.nn.sigmoid(yp_raw)
            ll = yt_raw * jnp.log(p + eps) + (1.0 - yt_raw) * jnp.log(1.0 - p + eps)

            # Mask rows past B (partial last block and/or extra megacore steps).
            row = jax.lax.broadcasted_iota(jnp.int32, (TB, 1), 0)
            row_g = (c * n_inner + i) * TB + row
            ll = jnp.where(row_g < B, ll, 0.0)

            acc_ref[...] = acc_ref[...] + jnp.sum(ll, axis=0, keepdims=True)

            @pl.when(i == pl.num_programs(1) - 1)
            def _finalize():
                out_ref[...] = acc_ref[...] * neg_inv_b         # const mult, no divide

        t_pad = _round_up(T, 128)
        footprint = (2 * TB * t_pad * (isz_p + isz_t)    # 2 pipeline bufs x 2 inputs
                     + 4 * TB * 128 * 4                  # idx blocks (lane-padded)
                     + (2 << 20))                        # headroom
        vmem_limit = int(min(vmem_cap, max(32 * 1024 * 1024, footprint)))

        cost = pl.CostEstimate(
            flops=6 * B * T + 16 * B,              # selects/adds for gather + loss math
            transcendentals=3 * B,                 # sigmoid + 2 logs per row
            bytes_accessed=B * T * (isz_p + isz_t) + B * 4 + NC * 4,
        )

        out = pl.pallas_call(
            kernel,
            out_shape=jax.ShapeDtypeStruct((NC, 1), jnp.float32),
            grid=(NC, n_inner),
            in_specs=[
                pl.BlockSpec((TB, 1), block_map),     # idx    (B, 1) int32
                pl.BlockSpec((TB, T), block_map),     # y_pred (B, T)
                pl.BlockSpec((TB, T), block_map),     # y_true (B, T)
            ],
            out_specs=pl.BlockSpec((1, 1), lambda c, i: (c, 0)),
            scratch_shapes=[pltpu.VMEM((1, 1), jnp.float32)],
            compiler_params=pltpu.CompilerParams(
                dimension_semantics=("parallel", "arbitrary"),
                vmem_limit_bytes=vmem_limit,
            ),
            cost_estimate=cost,
        )(idx, y_pred, y_true)
        # Sum the per-core partial sums (already scaled by -1/B).
        return jnp.sum(out)

    return loss_fn


def _reference(y_pred, y_true, lengths, lagging, eps=1e-7):
    # Pure-JAX reference mirroring the PyTorch forward.
    B = y_pred.shape[0]
    yp = jax.nn.sigmoid(y_pred)
    idx = (lengths.astype(jnp.int32) - lagging).reshape(B, 1)
    ypg = jnp.take_along_axis(yp, idx, axis=1).squeeze(-1)
    ytg = jnp.take_along_axis(y_true, idx, axis=1).squeeze(-1)
    loss = ytg * jnp.log(ypg + eps) + (1.0 - ytg) * jnp.log(1.0 - ypg + eps)
    return -loss.sum() / B


if __name__ == "__main__":
    lagging = 1
    eps = 1e-7
    B, T = 8, 16

    key = jax.random.PRNGKey(0)
    k1, k2, k3 = jax.random.split(key, 3)
    y_pred = jax.random.normal(k1, (B, T), dtype=jnp.float32)
    y_true = jax.random.bernoulli(k2, 0.5, (B, T)).astype(jnp.float32)
    # lengths in [lagging+1, T] so that lengths - lagging is a valid index.
    lengths = jax.random.randint(k3, (B,), lagging + 1, T + 1, dtype=jnp.int32)

    loss_fn = make_next_basket_loss(lagging, eps)
    out = jax.block_until_ready(loss_fn(y_pred, y_true, lengths))

    ref = _reference(y_pred, y_true, lengths, lagging, eps)
    assert jnp.allclose(out, ref, rtol=1e-5, atol=1e-5), (out, ref)

    print("KERNEL_OK")
</pallas_src>

<mosaic_0001>
module attributes {stable_mosaic.version = 11 : i64} {
  func.func @kernel(%arg0: i32, %arg1: i32, %arg2: memref<8x1xi32, #tpu.memory_space<vmem>>, %arg3: memref<8x16xf32, #tpu.memory_space<vmem>>, %arg4: memref<8x16xf32, #tpu.memory_space<vmem>>, %arg5: memref<1x1xf32, #tpu.memory_space<vmem>>, %arg6: memref<1x1xf32, #tpu.memory_space<vmem>>) attributes {dimension_semantics = [#tpu.dimension_semantics<parallel>, #tpu.dimension_semantics<arbitrary>], iteration_bounds = array<i64: 1, 1>, scalar_prefetch = 0 : i64, scratch_operands = 1 : i64, tpu.core_type = #tpu.core_type<tc>, window_params = [{transform_indices = @transform_0, window_bounds = array<i64: 8, 1>}, {transform_indices = @transform_1, window_bounds = array<i64: 8, 16>}, {transform_indices = @transform_2, window_bounds = array<i64: 8, 16>}, {transform_indices = @transform_3, window_bounds = array<i64: 1, 1>}]} {
    %c0_i32 = arith.constant 0 : i32
    %0 = arith.cmpi eq, %arg1, %c0_i32 : i32
    %1 = arith.extui %0 : i1 to i32
    %c0_i32_0 = arith.constant 0 : i32
    %2 = arith.cmpi ne, %1, %c0_i32_0 : i32
    scf.if %2 {
      %cst_23 = arith.constant 0.000000e+00 : f32
      %54 = vector.broadcast %cst_23 : f32 to vector<1x1xf32>
      %c0_24 = arith.constant 0 : index
      %c0_25 = arith.constant 0 : index
      %55 = vector.load %arg6[%c0_24, %c0_25] : memref<1x1xf32, #tpu.memory_space<vmem>>, vector<1x1xf32>
      tpu.vector_store %arg6[%c0_24, %c0_25], %54 {strides = array<i32>} : memref<1x1xf32, #tpu.memory_space<vmem>>, vector<1x1xf32>,
    } else {
    }
    %3 = tpu.iota {dimensions = array<i32: 1>} : vector<1x16xi32>
    %c0 = arith.constant 0 : index
    %c0_1 = arith.constant 0 : index
    %4 = vector.load %arg2[%c0, %c0_1] : memref<8x1xi32, #tpu.memory_space<vmem>>, vector<8x1xi32>
    %5 = vector.broadcast %3 : vector<1x16xi32> to vector<8x16xi32>
    %6 = vector.broadcast %4 : vector<8x1xi32> to vector<8x16xi32>
    %7 = arith.cmpi eq, %5, %6 : vector<8x16xi32>
    %c0_2 = arith.constant 0 : index
    %c0_3 = arith.constant 0 : index
    %8 = vector.load %arg3[%c0_2, %c0_3] : memref<8x16xf32, #tpu.memory_space<vmem>>, vector<8x16xf32>
    %c0_4 = arith.constant 0 : index
    %c0_5 = arith.constant 0 : index
    %9 = vector.load %arg4[%c0_4, %c0_5] : memref<8x16xf32, #tpu.memory_space<vmem>>, vector<8x16xf32>
    %cst = arith.constant 0.000000e+00 : f32
    %10 = vector.broadcast %cst : f32 to vector<8x16xf32>
    %11 = arith.select %7, %8, %10 : vector<8x16xi1>, vector<8x16xf32>
    %cst_6 = arith.constant dense<0.000000e+00> : vector<8xf32>
    %12 = vector.multi_reduction <add>, %11, %cst_6 [1] : vector<8x16xf32> to vector<8xf32>
    %13 = vector.shape_cast %12 : vector<8xf32> to vector<8x1xf32>
    %cst_7 = arith.constant 0.000000e+00 : f32
    %14 = vector.broadcast %cst_7 : f32 to vector<8x16xf32>
    %15 = arith.select %7, %9, %14 : vector<8x16xi1>, vector<8x16xf32>
    %cst_8 = arith.constant dense<0.000000e+00> : vector<8xf32>
    %16 = vector.multi_reduction <add>, %15, %cst_8 [1] : vector<8x16xf32> to vector<8xf32>
    %17 = vector.shape_cast %16 : vector<8xf32> to vector<8x1xf32>
    %18 = arith.negf %13 : vector<8x1xf32>
    %19 = math.exp %18 : vector<8x1xf32>
    %cst_9 = arith.constant 1.000000e+00 : f32
    %20 = vector.broadcast %cst_9 : f32 to vector<8x1xf32>
    %21 = arith.addf %20, %19 : vector<8x1xf32>
    %22 = arith.divf %20, %21 : vector<8x1xf32>
    %cst_10 = arith.constant 1.000000e-07 : f32
    %23 = vector.broadcast %cst_10 : f32 to vector<8x1xf32>
    %24 = arith.addf %22, %23 : vector<8x1xf32>
    %25 = math.log %24 : vector<8x1xf32>
    %26 = arith.mulf %17, %25 : vector<8x1xf32>
    %cst_11 = arith.constant 1.000000e+00 : f32
    %27 = vector.broadcast %cst_11 : f32 to vector<8x1xf32>
    %28 = arith.subf %27, %17 : vector<8x1xf32>
    %cst_12 = arith.constant 1.000000e+00 : f32
    %29 = vector.broadcast %cst_12 : f32 to vector<8x1xf32>
    %30 = arith.subf %29, %22 : vector<8x1xf32>
    %cst_13 = arith.constant 1.000000e-07 : f32
    %31 = vector.broadcast %cst_13 : f32 to vector<8x1xf32>
    %32 = arith.addf %30, %31 : vector<8x1xf32>
    %33 = math.log %32 : vector<8x1xf32>
    %34 = arith.mulf %28, %33 : vector<8x1xf32>
    %35 = arith.addf %26, %34 : vector<8x1xf32>
    %36 = tpu.iota {dimensions = array<i32: 0>} : vector<8x1xi32>
    %c1_i32 = arith.constant 1 : i32
    %37 = arith.muli %arg0, %c1_i32 : i32
    %38 = arith.addi %37, %arg1 : i32
    %c8_i32 = arith.constant 8 : i32
    %39 = arith.muli %38, %c8_i32 : i32
    %40 = vector.broadcast %39 : i32 to vector<8x1xi32>
    %41 = arith.addi %40, %36 : vector<8x1xi32>
    %c8_i32_14 = arith.constant 8 : i32
    %42 = vector.broadcast %c8_i32_14 : i32 to vector<8x1xi32>
    %43 = arith.cmpi slt, %41, %42 : vector<8x1xi32>
    %cst_15 = arith.constant 0.000000e+00 : f32
    %44 = vector.broadcast %cst_15 : f32 to vector<8x1xf32>
    %45 = arith.select %43, %35, %44 : vector<8x1xi1>, vector<8x1xf32>
    %c0_16 = arith.constant 0 : index
    %c0_17 = arith.constant 0 : index
    %46 = vector.load %arg6[%c0_16, %c0_17] : memref<1x1xf32, #tpu.memory_space<vmem>>, vector<1x1xf32>
    %cst_18 = arith.constant dense<0.000000e+00> : vector<1xf32>
    %47 = vector.multi_reduction <add>, %45, %cst_18 [0] : vector<8x1xf32> to vector<1xf32>
    %48 = vector.shape_cast %47 : vector<1xf32> to vector<1x1xf32>
    %49 = arith.addf %46, %48 : vector<1x1xf32>
    %c0_19 = arith.constant 0 : index
    %c0_20 = arith.constant 0 : index
    %50 = vector.load %arg6[%c0_19, %c0_20] : memref<1x1xf32, #tpu.memory_space<vmem>>, vector<1x1xf32>
    tpu.vector_store %arg6[%c0_19, %c0_20], %49 {strides = array<i32>} : memref<1x1xf32, #tpu.memory_space<vmem>>, vector<1x1xf32>,
    %c0_i32_21 = arith.constant 0 : i32
    %51 = arith.cmpi eq, %arg1, %c0_i32_21 : i32
    %52 = arith.extui %51 : i1 to i32
    %c0_i32_22 = arith.constant 0 : i32
    %53 = arith.cmpi ne, %52, %c0_i32_22 : i32
    scf.if %53 {
      %c0_23 = arith.constant 0 : index
      %c0_24 = arith.constant 0 : index
      %54 = vector.load %arg6[%c0_23, %c0_24] : memref<1x1xf32, #tpu.memory_space<vmem>>, vector<1x1xf32>
      %cst_25 = arith.constant -1.250000e-01 : f32
      %55 = vector.broadcast %cst_25 : f32 to vector<1x1xf32>
      %56 = arith.mulf %54, %55 : vector<1x1xf32>
      %c0_26 = arith.constant 0 : index
      %c0_27 = arith.constant 0 : index
      %57 = vector.load %arg5[%c0_26, %c0_27] : memref<1x1xf32, #tpu.memory_space<vmem>>, vector<1x1xf32>
      tpu.vector_store %arg5[%c0_26, %c0_27], %56 {strides = array<i32>} : memref<1x1xf32, #tpu.memory_space<vmem>>, vector<1x1xf32>,
    } else {
    }
    return
  }
  func.func @transform_0(%arg0: i32, %arg1: i32) -> (i32, i32) {
    %c1_i32 = arith.constant 1 : i32
    %0 = arith.muli %arg0, %c1_i32 : i32
    %1 = arith.addi %0, %arg1 : i32
    %c0_i32 = arith.constant 0 : i32
    %2 = arith.minsi %1, %c0_i32 : i32
    %c0_i32_0 = arith.constant 0 : i32
    %c0_i32_1 = arith.constant 0 : i32
    return %2, %c0_i32_0 : i32, i32
  }
  func.func @transform_1(%arg0: i32, %arg1: i32) -> (i32, i32) {
    %c1_i32 = arith.constant 1 : i32
    %0 = arith.muli %arg0, %c1_i32 : i32
    %1 = arith.addi %0, %arg1 : i32
    %c0_i32 = arith.constant 0 : i32
    %2 = arith.minsi %1, %c0_i32 : i32
    %c0_i32_0 = arith.constant 0 : i32
    %c0_i32_1 = arith.constant 0 : i32
    return %2, %c0_i32_0 : i32, i32
  }
  func.func @transform_2(%arg0: i32, %arg1: i32) -> (i32, i32) {
    %c1_i32 = arith.constant 1 : i32
    %0 = arith.muli %arg0, %c1_i32 : i32
    %1 = arith.addi %0, %arg1 : i32
    %c0_i32 = arith.constant 0 : i32
    %2 = arith.minsi %1, %c0_i32 : i32
    %c0_i32_0 = arith.constant 0 : i32
    %c0_i32_1 = arith.constant 0 : i32
    return %2, %c0_i32_0 : i32, i32
  }
  func.func @transform_3(%arg0: i32, %arg1: i32) -> (i32, i32) {
    %c0_i32 = arith.constant 0 : i32
    %c0_i32_0 = arith.constant 0 : i32
    return %arg0, %c0_i32 : i32, i32
  }
}

</mosaic_0001>

<llo_original>
// kernel: tpu_custom_call.1
$region0: #{tpu_custom_call.1}
  #allocation0 [shape = 'u32[]', space=smem, size = 0x4, offset = 0x4, fixed_abs, tag = 'smem constant byte address 0x4 - core index']
  #allocation1 [shape = 'u32[72,128]{1,0:T(1,128)}', space=vmem, size = 0x9000, scoped, tag = 'internal scratch']
  #allocation2 [shape = 'f32[1,1]{1,0:T(1,128)}', space=vmem, size = 0x200, scoped, tag = 'scratch operand']
  %s0 = inlined_call_operand.vmem [shape: s32[8,1], index: 0, kind: input, shape index: {}]
  %s1 = inlined_call_operand.vmem [shape: f32[8,16], index: 1, kind: input, shape index: {}]
  %s2 = inlined_call_operand.hbm [shape: f32[8,16], index: 2, kind: input, shape index: {}]
  %s3 = inlined_call_operand.hbm [shape: f32[1,1], index: 3, kind: output, shape index: {}]
  %s4 = sld [smem:[#allocation0]]
  $region34: #{tpu_custom_call.1} parent=0
    _
  %s6 = ssub.s32 1, %s4
  %s7 = scalar_select 0, %s6, %s4
  $region1: #{tpu_custom_call.1} parent=0
    #allocation3 [shape = 'u8[4096]{0}', space=vmem, size = 0x1000, scoped, tag = 'input window, operand 2, single buffered']
    #allocation4 [shape = 's32[1]{0}', space=sflag, size = 0x4, scoped, tag = 'scoped memory for tpu_custom_call.1']
    #allocation5 [shape = 's32[1]{0}', space=sflag, size = 0x4, scoped, tag = 'scoped memory for tpu_custom_call.1']
    #allocation6 [shape = 'u8[512]{0}', space=vmem, size = 0x400, scoped, tag = 'output window, operand 0, single buffered']
    %8 = vsyncpa [#allocation4], 0
    %9 = vsyncpa [#allocation5], 0
    // Predicated region
    $region2: #{tpu_custom_call.1} parent=1 // pred_check
      _
    $region3: #{tpu_custom_call.1} parent=1 // pred_check_branch
      %11 = sbr.rel (0) target = $region5
    $region4: #{tpu_custom_call.1} parent=1 // pred_region
      %s12 = sadd.s32 0, 0
      %p13 = scmp.lt.s32.totalorder %s12, 0
      %s14 = scalar_select %p13, %s12, 0
      %p15 = scmp.lt.s32.totalorder %s14, 0
      %s16 = scalar_select %p15, %s14, 0
      %s17 = smul.addr %s16, 8
      %s18 = scalar_lea.vmem %s0, %s17
      %s19 = sadd.s32 0, 0
      %p20 = scmp.lt.s32.totalorder %s19, 0
      %s21 = scalar_select %p20, %s19, 0
    $region5: #{tpu_custom_call.1} parent=1 // pred_fallthru
      _
    // Predicated region
    $region6: #{tpu_custom_call.1} parent=1 // pred_check
      _
    $region7: #{tpu_custom_call.1} parent=1 // pred_check_branch
      %23 = sbr.rel (0) target = $region9
    $region8: #{tpu_custom_call.1} parent=1 // pred_region
      %s24 = sadd.s32 0, 0
      %p25 = scmp.lt.s32.totalorder %s24, 0
      %s26 = scalar_select %p25, %s24, 0
      %p27 = scmp.lt.s32.totalorder %s26, 0
      %s28 = scalar_select %p27, %s26, 0
      %s29 = smul.addr %s28, 8
      %s30 = scalar_lea.vmem %s1, %s29
      %s31 = sadd.s32 0, 0
      %p32 = scmp.lt.s32.totalorder %s31, 0
      %s33 = scalar_select %p32, %s31, 0
    $region9: #{tpu_custom_call.1} parent=1 // pred_fallthru
      _
    // Predicated region
    $region10: #{tpu_custom_call.1} parent=1 // pred_check
      _
    $region11: #{tpu_custom_call.1} parent=1 // pred_check_branch
      %35 = sbr.rel (0) target = $region13
    $region12: #{tpu_custom_call.1} parent=1 // pred_region
      %s36 = sadd.s32 0, 0
      %p37 = scmp.lt.s32.totalorder %s36, 0
      %s38 = scalar_select %p37, %s36, 0
      %40 = vsyncadd [#allocation4], 0
      %s41 = smul.addr %s38, 8
      %s42 = scalar_lea.hbm %s2, %s41
      %s44 = sshll.u32 %s42, 4
      %s45 = int_to_ptr.hbm [resolvable:$true] %s44
      %s46 = sshll.u32 [#allocation3], 4
      %s47 = int_to_ptr.vmem [resolvable:$true] %s46
      %49 = dma.hbm_to_vmem [thread:$0]  %s45, 128, %s47, [#allocation4]
    $region13: #{tpu_custom_call.1} parent=1 // pred_fallthru
      _
    // Predicated region
    $region14: #{tpu_custom_call.1} parent=1 // pred_check
      _
    $region15: #{tpu_custom_call.1} parent=1 // pred_check_branch
      %51 = sbr.rel (0) target = $region17
    $region16: #{tpu_custom_call.1} parent=1 // pred_region
      %53 = dma.done [#allocation4], 128
    $region17: #{tpu_custom_call.1} parent=1 // pred_fallthru
      _
    %s54 = sadd.s32 0, 0
    %p55 = scmp.lt.s32.totalorder %s54, 0
    %s56 = scalar_select %p55, %s54, 0
    %p57 = scmp.lt.s32.totalorder %s56, 0
    %s58 = scalar_select %p57, %s56, 0
    %s59 = smul.addr %s58, 8
    %s60 = scalar_lea.vmem %s0, %s59
    %s61 = sadd.s32 0, 0
    %p62 = scmp.lt.s32.totalorder %s61, 0
    %s63 = scalar_select %p62, %s61, 0
    %p64 = scmp.lt.s32.totalorder %s63, 0
    %s65 = scalar_select %p64, %s63, 0
    %s66 = smul.addr %s65, 8
    %s67 = scalar_lea.vmem %s1, %s66
    %s68 = sadd.s32 0, 0
    %p69 = scmp.lt.s32.totalorder %s68, 0
    %s70 = scalar_select %p69, %s68, 0
    %p71 = scmp.lt.s32.totalorder %s70, 0
    %s72 = scalar_select %p71, %s70, 0
    %s73 = smul.addr %s72, 8
    %s74 = scalar_lea.vmem %s0, %s73
    %s75 = sadd.s32 0, 0
    %p76 = scmp.lt.s32.totalorder %s75, 0
    %s77 = scalar_select %p76, %s75, 0
    %s78 = sadd.s32 0, 0
    %p79 = scmp.lt.s32.totalorder %s78, 0
    %s80 = scalar_select %p79, %s78, 0
    %p81 = scmp.lt.s32.totalorder %s80, 0
    %s82 = scalar_select %p81, %s80, 0
    %s83 = smul.addr %s82, 8
    %s84 = scalar_lea.vmem %s1, %s83
    %s85 = sadd.s32 0, 0
    %p86 = scmp.lt.s32.totalorder %s85, 0
    %s87 = scalar_select %p86, %s85, 0
    %s88 = sadd.s32 0, 0
    %p89 = scmp.lt.s32.totalorder %s88, 0
    %s90 = scalar_select %p89, %s88, 0
    %p91 = scmp.eq.s32.totalorder 0, 0
    // Predicated region
    $region18: #{tpu_custom_call.1} parent=1 // pred_check
      %p92 = pneg %p91
    $region19: #{tpu_custom_call.1} parent=1 // pred_check_branch
      %94 = sbr.rel (%p92) target = $region21
    $region20: #{tpu_custom_call.1} parent=1 // pred_region
      %vm95 = vcmask 0
      %96 = vst.msk [vmem:[#allocation2] sm:$0x1] %vm95, 0.0
    $region21: #{tpu_custom_call.1} parent=1 // pred_fallthru
      _
    %v97 = vlaneseq
    %v98 = vand.u32 %v97, 127
    %v99 = vld [vmem:[%s74] sm:$0xff]
    %100 = vset.pattern.permute.xlu0 0
    %101 = vperm.xlu0 %100, %v99
    %v102 = vpop.permute.xlu0 %101
    %vm103 = vcmp.eq.s32.totalorder %v98, %v102
    %v104 = vld [vmem:[%s84] sm:$0xff]
    %v105 = vld [vmem:[#allocation3] sm:$0xff]
    %v106 = vsel %vm103, %v104, 0.0
    %vm107 = vcmask 130048
    %v108 = vsel %vm107, %v106, 0.0
    %109 = vadd.xlane.f32.xlu0 %v108
    %v110 = vpop.xlane.xlu0 %109
    %v111 = vsel %vm103, %v105, 0.0
    %v112 = vsel %vm107, %v111, 0.0
    %113 = vadd.xlane.f32.xlu0 %v112
    %v114 = vpop.xlane.xlu0 %113
    %v115 = vxor.u32 %v110, 2147483648
    %v116 = vmul.f32 %v115, 1.442695
    %v117 = vpow.pop %v116
    %v118 = vadd.f32 %v117, 1.0
    %v119 = vrcp.pop %v118
    %v120 = vmul.f32 %v118, %v119
    %v121 = vsub.f32 1.0, %v120
    %v122 = vmul.f32 %v119, %v121
    %v123 = vadd.f32 %v119, %v122
    %vm124 = vweird.f32 %v118
    %vm125 = vweird.f32 %v119
    %vm126 = vmor %vm124, %vm125
    %v127 = vsel %vm126, %v119, %v123
    %v128 = vand.u32 2147483647, %v118
    %vm129 = vcmp.eq.f32.partialorder %v128, 8.507059e+37
    %v130 = vand.u32 %v118, 2147483648
    %v131 = vor.u32 1.1754944e-38, %v130
    %v132 = vsel %vm129, %v131, %v127
    %v133 = vmul.f32 1.0, %v132
    %v134 = vadd.f32 %v133, 1e-07
    %v135 = vlog2.pop %v134
    %v136 = vmul.f32 %v135, 0.6931472
    %v137 = vmul.f32 %v114, %v136
    %v138 = vsub.f32 1.0, %v114
    %v139 = vsub.f32 1.0, %v133
    %v140 = vadd.f32 %v139, 1e-07
    %v141 = vlog2.pop %v140
    %v142 = vmul.f32 %v141, 0.6931472
    %v143 = vmul.f32 %v138, %v142
    %v144 = vadd.f32 %v137, %v143
    %v145 = vlaneseq
    %v146 = vshrl.u32 %v145, 7
    %s147 = sadd.s32 0, 0
    %s148 = smul.u32 %s147, 8
    %v149 = vstv %s148
    %v150 = vadd.s32 %v149, %v146
    %vm151 = vcmp.lt.s32.totalorder %v150, 8
    %v152 = vsel %vm151, %v144, 0.0
    %v153 = vld [vmem:[#allocation2] sm:$0x1]
    %v154 = vrot.slane %v152, 4
    %v155 = vadd.f32 %v152, %v154
    %v156 = vrot.slane %v155, 2
    %v157 = vadd.f32 %v155, %v156
    %v158 = vrot.slane %v157, 1
    %v159 = vadd.f32 %v157, %v158
    %v160 = vadd.f32 %v153, %v159
    %vm161 = vcmask 0
    %162 = vst.msk [vmem:[#allocation2] sm:$0x1] %vm161, %v160
    // Predicated region
    $region22: #{tpu_custom_call.1} parent=1 // pred_check
      %p163 = pneg %p91
    $region23: #{tpu_custom_call.1} parent=1 // pred_check_branch
      %165 = sbr.rel (%p163) target = $region25
    $region24: #{tpu_custom_call.1} parent=1 // pred_region
      %v166 = vld [vmem:[#allocation2] sm:$0x1]
      %v167 = vmul.f32 %v166, -0.125
      %168 = vst.msk [vmem:[#allocation6] sm:$0x1] %vm161, %v167
    $region25: #{tpu_custom_call.1} parent=1 // pred_fallthru
      _
    // Predicated region
    $region26: #{tpu_custom_call.1} parent=1 // pred_check
      _
    $region27: #{tpu_custom_call.1} parent=1 // pred_check_branch
      %170 = sbr.rel (0) target = $region29
    $region28: #{tpu_custom_call.1} parent=1 // pred_region
      %172 = vsyncadd [#allocation5], 0
      %s174 = sshll.u32 [#allocation6], 4
      %s175 = int_to_ptr.vmem [resolvable:$true] %s174
      %s176 = sshll.u32 %s3, 4
      %s177 = int_to_ptr.hbm [resolvable:$true] %s176
      %179 = dma.vmem_to_hbm [thread:$0]  %s175, 16, %s177, [#allocation5]
    $region29: #{tpu_custom_call.1} parent=1 // pred_fallthru
      _
    // Predicated region
    $region30: #{tpu_custom_call.1} parent=1 // pred_check
      _
    $region31: #{tpu_custom_call.1} parent=1 // pred_check_branch
      %181 = sbr.rel (0) target = $region33
    $region32: #{tpu_custom_call.1} parent=1 // pred_region
      %183 = dma.done [#allocation5], 16
    $region33: #{tpu_custom_call.1} parent=1 // pred_fallthru
      _
    %184 = vsyncpa [#allocation4], 1
    %185 = vsyncpa [#allocation5], 1

</llo_original>
